<compile_context>
chip_gen: v5e
topology: v5e:2x2
jax: 0.10.0
libtpu: 0.0.40
codegen_flags: <defaults>
</compile_context>

<pallas_src>
import functools

import jax
import jax.numpy as jnp
from jax import lax
from jax.experimental import pallas as pl
from jax.experimental.pallas import tpu as pltpu

LN_EPS = 1e-5


# ----------------------------------------------------------------------------
# Kernel 1: patch embedding + cls token + positional embedding (grid over batch)
#   row 0       = cls + pos[0]
#   rows 1..S-1 = patches @ WpT + bp + pos[1:]
# ----------------------------------------------------------------------------
def _patch_embed_kernel(p_ref, wpT_ref, bp_ref, cls_ref, pos_ref, o_ref):
    # p_ref: (1, P, F) bf16   wpT_ref: (F, D) bf16   bp_ref: (1, D) f32
    # cls_ref: (1, D) f32     pos_ref: (S, D) f32    o_ref: (1, S, D) f32
    e = jnp.dot(p_ref[0], wpT_ref[...], preferred_element_type=jnp.float32)
    e = e + bp_ref[...] + pos_ref[1:]                      # (P, D)
    row0 = cls_ref[...] + pos_ref[:1]                      # (1, D)
    o_ref[0] = jnp.concatenate([row0, e], axis=0)          # (S, D)


def patch_embed(patches, wpT, bp, cls, pos):
    N, P, F = patches.shape
    D = wpT.shape[1]
    S = pos.shape[0]
    return pl.pallas_call(
        _patch_embed_kernel,
        out_shape=jax.ShapeDtypeStruct((N, S, D), jnp.float32),
        grid=(N,),
        in_specs=[
            pl.BlockSpec((1, P, F), lambda i: (i, 0, 0)),
            pl.BlockSpec((F, D), lambda i: (0, 0)),
            pl.BlockSpec((1, D), lambda i: (0, 0)),
            pl.BlockSpec((1, D), lambda i: (0, 0)),
            pl.BlockSpec((S, D), lambda i: (0, 0)),
        ],
        out_specs=pl.BlockSpec((1, S, D), lambda i: (i, 0, 0)),
        compiler_params=pltpu.CompilerParams(dimension_semantics=("parallel",)),
    )(patches, wpT, bp, cls, pos)


# ----------------------------------------------------------------------------
# Kernel 2: ALL encoder blocks fused (shared weights), grid = (batch, block)
#   res1 = MHSA(LayerNorm_(S,D)(Z))
#   Z'   = Linear(LayerNorm_(S,D)(res1 + Z))
# Z stays resident in a VMEM scratch across the "arbitrary" block axis.
# ----------------------------------------------------------------------------
def _encoder_stack_kernel(num_heads, hidden_dim,
                          z_ref, ln1w_ref, ln1b_ref,
                          wqkvT_ref, bqkv_ref, woT_ref, bo_ref,
                          ln2w_ref, ln2b_ref, w2T_ref, b2_ref,
                          o_ref, z_vmem):
    blk = pl.program_id(1)

    @pl.when(blk == 0)
    def _():
        z_vmem[...] = z_ref[0]                     # load initial Z for this image

    z = z_vmem[...]                                # (S, D) f32
    S, D = z.shape
    H = num_heads
    inv_sd = 1.0 / float(S * D)

    # --- LayerNorm over (S, D) jointly, single pass (f32 statistics) ---
    s1 = jnp.sum(z)
    s2 = jnp.sum(z * z)
    mu = s1 * inv_sd
    var = s2 * inv_sd - mu * mu
    zn = (z - mu) * lax.rsqrt(var + LN_EPS) * ln1w_ref[...] + ln1b_ref[...]
    zn_bf = zn.astype(jnp.bfloat16)

    # --- fused q/k/v projection: one (S, D) @ (D, 3*H*D) matmul ---
    qkv = jnp.dot(zn_bf, wqkvT_ref[...],
                  preferred_element_type=jnp.float32) + bqkv_ref[...]   # (S, 3HD)

    # --- per-head attention (scores/softmax are inherently per-head) ---
    scale = 1.0 / (float(hidden_dim) ** 2)
    contract_last = (((1,), (1,)), ((), ()))       # q @ k.T without transposing k
    heads = []
    for h in range(H):                             # static unroll, H is small
        q = qkv[:, h * D:(h + 1) * D].astype(jnp.bfloat16)
        k = qkv[:, (H + h) * D:(H + h + 1) * D].astype(jnp.bfloat16)
        v = qkv[:, (2 * H + h) * D:(2 * H + h + 1) * D].astype(jnp.bfloat16)
        s = lax.dot_general(q, k, contract_last,
                            preferred_element_type=jnp.float32) * scale  # (S, S)
        m = jnp.max(s, axis=-1, keepdims=True)
        e = jnp.exp(s - m)
        p = e * pl.reciprocal(jnp.sum(e, axis=-1, keepdims=True), approx=True)
        heads.append(jnp.dot(p.astype(jnp.bfloat16), v,
                             preferred_element_type=jnp.float32))        # (S, D)

    # --- hstack(heads) @ Wo.T as one (S, H*D) @ (H*D, D) matmul ---
    hcat = jnp.concatenate(heads, axis=-1).astype(jnp.bfloat16)          # (S, HD)
    attn = jnp.dot(hcat, woT_ref[...],
                   preferred_element_type=jnp.float32) + bo_ref[...]     # (S, D)

    # --- residual, second joint LayerNorm, then Linear(D, D) ---
    r = attn + z
    t1 = jnp.sum(r)
    t2 = jnp.sum(r * r)
    mu2 = t1 * inv_sd
    var2 = t2 * inv_sd - mu2 * mu2
    rn = (r - mu2) * lax.rsqrt(var2 + LN_EPS) * ln2w_ref[...] + ln2b_ref[...]
    z_new = jnp.dot(rn.astype(jnp.bfloat16), w2T_ref[...],
                    preferred_element_type=jnp.float32) + b2_ref[...]
    z_vmem[...] = z_new

    @pl.when(blk == pl.num_programs(1) - 1)
    def _():
        o_ref[0] = z_new.astype(o_ref.dtype)


def encoder_stack(z, p, num_heads, hidden_dim, num_blocks):
    N, S, D = z.shape
    H = num_heads
    kernel = functools.partial(_encoder_stack_kernel, num_heads, hidden_dim)
    sd = pl.BlockSpec((S, D), lambda i, b: (0, 0))
    d1 = pl.BlockSpec((1, D), lambda i, b: (0, 0))
    return pl.pallas_call(
        kernel,
        out_shape=jax.ShapeDtypeStruct((N, S, D), jnp.float32),
        grid=(N, num_blocks),
        in_specs=[
            pl.BlockSpec((1, S, D), lambda i, b: (i, 0, 0)),     # Z (fetched once/image)
            sd, sd,                                              # ln1 w/b
            pl.BlockSpec((D, 3 * H * D), lambda i, b: (0, 0)),   # fused qkv weight
            pl.BlockSpec((1, 3 * H * D), lambda i, b: (0, 0)),   # fused qkv bias
            pl.BlockSpec((H * D, D), lambda i, b: (0, 0)),       # output proj Wo.T
            d1,                                                  # bo
            sd, sd,                                              # ln2 w/b
            pl.BlockSpec((D, D), lambda i, b: (0, 0)),           # transformer_2 W.T
            d1,                                                  # b2
        ],
        out_specs=pl.BlockSpec((1, S, D), lambda i, b: (i, 0, 0)),
        scratch_shapes=[pltpu.VMEM((S, D), jnp.float32)],
        compiler_params=pltpu.CompilerParams(
            dimension_semantics=("parallel", "arbitrary")),
    )(z, p["ln1_w"], p["ln1_b"], p["wqkvT"], p["bqkv"], p["woT"], p["bo"],
      p["ln2_w"], p["ln2_b"], p["w2T"], p["b2"])


# ----------------------------------------------------------------------------
# Kernel 3: MLP head  out = tanh(Z[:, 0] @ WhT + bh)   (whole batch in one step)
# ----------------------------------------------------------------------------
def _mlp_head_kernel(z_ref, whT_ref, bh_ref, o_ref):
    o_ref[...] = jnp.tanh(
        jnp.dot(z_ref[...].astype(jnp.bfloat16), whT_ref[...],
                preferred_element_type=jnp.float32) + bh_ref[...])


def mlp_head(z_cls, whT, bh):
    N, D = z_cls.shape
    O = whT.shape[1]
    return pl.pallas_call(
        _mlp_head_kernel,
        out_shape=jax.ShapeDtypeStruct((N, O), jnp.float32),
        grid=(1,),
        in_specs=[
            pl.BlockSpec((N, D), lambda i: (0, 0)),
            pl.BlockSpec((D, O), lambda i: (0, 0)),
            pl.BlockSpec((1, O), lambda i: (0, 0)),
        ],
        out_specs=pl.BlockSpec((N, O), lambda i: (0, 0)),
    )(z_cls, whT, bh)


# ----------------------------------------------------------------------------
# Parameter init (deterministic, PyTorch-layout shapes) and full forward
# ----------------------------------------------------------------------------
def init_params(key, img_shape, patch_size, hidden_dim, num_heads, out_dim):
    patch_flat = img_shape[0] * patch_size[0] * patch_size[1]
    num_patches = int(img_shape[0] * img_shape[1] / patch_size[0]) ** 2
    S = 1 + num_patches
    D = hidden_dim
    Hh = num_heads
    ks = jax.random.split(key, 16)

    def u(k, shape, scale):
        return jax.random.uniform(k, shape, jnp.float32, -scale, scale)

    # PyTorch-layout weights (out_features, in_features); biases 1-D.
    wp = u(ks[0], (D, patch_flat), 1.0 / patch_flat ** 0.5)
    bp = u(ks[1], (D,), 1.0 / patch_flat ** 0.5)
    cls = jax.random.uniform(ks[2], (1, D), jnp.float32)        # torch.rand
    pos = jax.random.uniform(ks[3], (S, D), jnp.float32)        # torch.rand
    wq = u(ks[4], (Hh, D, D), 1.0 / D ** 0.5)
    bq = u(ks[5], (Hh, D), 1.0 / D ** 0.5)
    wk = u(ks[6], (Hh, D, D), 1.0 / D ** 0.5)
    bk = u(ks[7], (Hh, D), 1.0 / D ** 0.5)
    wv = u(ks[8], (Hh, D, D), 1.0 / D ** 0.5)
    bv = u(ks[9], (Hh, D), 1.0 / D ** 0.5)
    wo = u(ks[10], (D, Hh * D), 1.0 / (Hh * D) ** 0.5)
    bo = u(ks[11], (D,), 1.0 / (Hh * D) ** 0.5)
    w2 = u(ks[12], (D, D), 1.0 / D ** 0.5)
    b2 = u(ks[13], (D,), 1.0 / D ** 0.5)
    wh = u(ks[14], (out_dim, D), 1.0 / D ** 0.5)
    bh = u(ks[15], (out_dim,), 1.0 / D ** 0.5)

    # Stack per-head q/k/v into one (D_in, 3*H*D_out) matrix so the kernel does a
    # single matmul.  Column layout: [q heads | k heads | v heads], head-major.
    def stackT(w):  # (H, D_out, D_in) -> (D_in, H*D_out) with cols h*D+j = w[h, j, :]
        return jnp.transpose(w, (2, 0, 1)).reshape(D, Hh * D)

    wqkvT = jnp.concatenate([stackT(wq), stackT(wk), stackT(wv)], axis=1)
    bqkv = jnp.concatenate([bq.reshape(-1), bk.reshape(-1), bv.reshape(-1)])

    bf16 = jnp.bfloat16
    params = {
        # patch embedding + cls/pos
        "wpT": wp.T.astype(bf16), "bp": bp.reshape(1, D),
        "cls": cls, "pos": pos,
        # encoder (shared across blocks)
        "ln1_w": jnp.ones((S, D), jnp.float32), "ln1_b": jnp.zeros((S, D), jnp.float32),
        "wqkvT": wqkvT.astype(bf16), "bqkv": bqkv.reshape(1, 3 * Hh * D),
        "woT": wo.T.astype(bf16), "bo": bo.reshape(1, D),
        "ln2_w": jnp.ones((S, D), jnp.float32), "ln2_b": jnp.zeros((S, D), jnp.float32),
        "w2T": w2.T.astype(bf16), "b2": b2.reshape(1, D),
        # head
        "whT": wh.T.astype(bf16), "bh": bh.reshape(1, out_dim),
    }
    cfg = {"patch_flat": patch_flat, "num_patches": num_patches,
           "hidden_dim": D, "num_heads": Hh}
    return params, cfg


def vit_forward(x, params, cfg, num_encoder_blocks):
    N = x.shape[0]
    # Raw reshape "patchify", exactly as the PyTorch module does (glue only).
    patches = x.reshape(N, cfg["num_patches"], cfg["patch_flat"]).astype(jnp.bfloat16)
    # Patch embedding fused with cls-token concat and positional add.
    Z = patch_embed(patches, params["wpT"], params["bp"],
                    params["cls"], params["pos"])                 # (N, S, D) f32
    # All encoder blocks (shared weights) fused into one pallas_call.
    Z = encoder_stack(Z, params, cfg["num_heads"], cfg["hidden_dim"],
                      num_encoder_blocks)
    return mlp_head(Z[:, 0], params["whT"], params["bh"])          # (N, out_dim)


if __name__ == "__main__":
    # Small config consistent with the module's derived shapes:
    #   img_shape=(1,16,16), patch_size=(4,4)
    #   -> patch_flat = 1*4*4 = 16, num_patches = int(1*16/4)**2 = 16, seq = 17
    img_shape = (1, 16, 16)
    patch_size = (4, 4)
    hidden_dim = 32
    num_heads = 2
    out_dim = 8
    num_encoder_blocks = 2
    N = 2

    key = jax.random.PRNGKey(0)
    kx, kp = jax.random.split(key)
    x = jax.random.normal(kx, (N,) + img_shape, jnp.float32)        # NCHW

    params, cfg = init_params(kp, img_shape, patch_size, hidden_dim, num_heads, out_dim)
    out = vit_forward(x, params, cfg, num_encoder_blocks)
    out = jax.block_until_ready(out)
    assert out.shape == (N, out_dim), out.shape
    print("KERNEL_OK")
</pallas_src>

<mosaic_0001>
module attributes {stable_mosaic.version = 11 : i64} {
  func.func @_patch_embed_kernel(%arg0: i32, %arg1: memref<1x16x16xbf16, #tpu.memory_space<vmem>>, %arg2: memref<16x32xbf16, #tpu.memory_space<vmem>>, %arg3: memref<1x32xf32, #tpu.memory_space<vmem>>, %arg4: memref<1x32xf32, #tpu.memory_space<vmem>>, %arg5: memref<17x32xf32, #tpu.memory_space<vmem>>, %arg6: memref<1x17x32xf32, #tpu.memory_space<vmem>>) attributes {dimension_semantics = [#tpu.dimension_semantics<parallel>], iteration_bounds = array<i64: 2>, scalar_prefetch = 0 : i64, scratch_operands = 0 : i64, tpu.core_type = #tpu.core_type<tc>, window_params = [{transform_indices = @transform_0, window_bounds = array<i64: 1, 16, 16>}, {pipeline_mode = #tpu.pipeline_mode<synchronous>, transform_indices = @transform_1, window_bounds = array<i64: 16, 32>}, {pipeline_mode = #tpu.pipeline_mode<synchronous>, transform_indices = @transform_2, window_bounds = array<i64: 1, 32>}, {pipeline_mode = #tpu.pipeline_mode<synchronous>, transform_indices = @transform_3, window_bounds = array<i64: 1, 32>}, {pipeline_mode = #tpu.pipeline_mode<synchronous>, transform_indices = @transform_4, window_bounds = array<i64: 17, 32>}, {transform_indices = @transform_5, window_bounds = array<i64: 1, 17, 32>}]} {
    %c0 = arith.constant 0 : index
    %c0_0 = arith.constant 0 : index
    %c0_1 = arith.constant 0 : index
    %0 = vector.load %arg1[%c0, %c0_0, %c0_1] : memref<1x16x16xbf16, #tpu.memory_space<vmem>>, vector<1x16x16xbf16>
    %1 = vector.shape_cast %0 : vector<1x16x16xbf16> to vector<16x16xbf16>
    %c0_2 = arith.constant 0 : index
    %c0_3 = arith.constant 0 : index
    %2 = vector.load %arg2[%c0_2, %c0_3] : memref<16x32xbf16, #tpu.memory_space<vmem>>, vector<16x32xbf16>
    %cst = arith.constant dense<0.000000e+00> : vector<16x32xf32>
    %3 = tpu.matmul %1, %2, %cst {dimension_numbers = #tpu.dot_dimension_numbers<[1], [0], [0], [1], [0, 0, 1, 1], [], []>} : vector<16x16xbf16>, vector<16x32xbf16>, vector<16x32xf32> -> vector<16x32xf32>
    %c0_4 = arith.constant 0 : index
    %c0_5 = arith.constant 0 : index
    %4 = vector.load %arg3[%c0_4, %c0_5] : memref<1x32xf32, #tpu.memory_space<vmem>>, vector<1x32xf32>
    %5 = vector.broadcast %4 : vector<1x32xf32> to vector<16x32xf32>
    %6 = arith.addf %3, %5 : vector<16x32xf32>
    %c1 = arith.constant 1 : index
    %c0_6 = arith.constant 0 : index
    %7 = vector.load %arg5[%c1, %c0_6] : memref<17x32xf32, #tpu.memory_space<vmem>>, vector<16x32xf32>
    %8 = arith.addf %6, %7 : vector<16x32xf32>
    %c0_7 = arith.constant 0 : index
    %c0_8 = arith.constant 0 : index
    %9 = vector.load %arg4[%c0_7, %c0_8] : memref<1x32xf32, #tpu.memory_space<vmem>>, vector<1x32xf32>
    %c0_9 = arith.constant 0 : index
    %c0_10 = arith.constant 0 : index
    %10 = vector.load %arg5[%c0_9, %c0_10] : memref<17x32xf32, #tpu.memory_space<vmem>>, vector<1x32xf32>
    %11 = arith.addf %9, %10 : vector<1x32xf32>
    %12 = tpu.concatenate %11, %8 in 0 : vector<1x32xf32>, vector<16x32xf32> -> vector<17x32xf32>
    %c0_11 = arith.constant 0 : index
    %c0_12 = arith.constant 0 : index
    %c0_13 = arith.constant 0 : index
    %13 = vector.load %arg6[%c0_11, %c0_12, %c0_13] : memref<1x17x32xf32, #tpu.memory_space<vmem>>, vector<1x17x32xf32>
    %14 = vector.shape_cast %13 : vector<1x17x32xf32> to vector<17x32xf32>
    %15 = vector.shape_cast %12 : vector<17x32xf32> to vector<1x17x32xf32>
    tpu.vector_store %arg6[%c0_11, %c0_12, %c0_13], %15 {strides = array<i32>} : memref<1x17x32xf32, #tpu.memory_space<vmem>>, vector<1x17x32xf32>,
    return
  }
  func.func @transform_0(%arg0: i32) -> (i32, i32, i32) {
    %c0_i32 = arith.constant 0 : i32
    %c0_i32_0 = arith.constant 0 : i32
    %c0_i32_1 = arith.constant 0 : i32
    return %arg0, %c0_i32, %c0_i32_0 : i32, i32, i32
  }
  func.func @transform_1(%arg0: i32) -> (i32, i32) {
    %c0_i32 = arith.constant 0 : i32
    %c0_i32_0 = arith.constant 0 : i32
    %c0_i32_1 = arith.constant 0 : i32
    return %c0_i32, %c0_i32_0 : i32, i32
  }
  func.func @transform_2(%arg0: i32) -> (i32, i32) {
    %c0_i32 = arith.constant 0 : i32
    %c0_i32_0 = arith.constant 0 : i32
    %c0_i32_1 = arith.constant 0 : i32
    return %c0_i32, %c0_i32_0 : i32, i32
  }
  func.func @transform_3(%arg0: i32) -> (i32, i32) {
    %c0_i32 = arith.constant 0 : i32
    %c0_i32_0 = arith.constant 0 : i32
    %c0_i32_1 = arith.constant 0 : i32
    return %c0_i32, %c0_i32_0 : i32, i32
  }
  func.func @transform_4(%arg0: i32) -> (i32, i32) {
    %c0_i32 = arith.constant 0 : i32
    %c0_i32_0 = arith.constant 0 : i32
    %c0_i32_1 = arith.constant 0 : i32
    return %c0_i32, %c0_i32_0 : i32, i32
  }
  func.func @transform_5(%arg0: i32) -> (i32, i32, i32) {
    %c0_i32 = arith.constant 0 : i32
    %c0_i32_0 = arith.constant 0 : i32
    %c0_i32_1 = arith.constant 0 : i32
    return %arg0, %c0_i32, %c0_i32_0 : i32, i32, i32
  }
}

</mosaic_0001>

<llo_original>
// kernel: tpu_custom_call.1
$region0: #{tpu_custom_call.1}
  #allocation0 [shape = 'u32[]', space=smem, size = 0x4, offset = 0x4, fixed_abs, tag = 'smem constant byte address 0x4 - core index']
  #allocation1 [shape = 'u32[72,128]{1,0:T(1,128)}', space=vmem, size = 0x9000, scoped, tag = 'internal scratch']
  %s0 = inlined_call_operand.hbm [shape: bf16[2,16,16], index: 0, kind: input, shape index: {}]
  %s1 = inlined_call_operand.hbm [shape: bf16[16,32], index: 1, kind: input, shape index: {}]
  %s2 = inlined_call_operand.vmem [shape: f32[1,32], index: 2, kind: input, shape index: {}]
  %s3 = inlined_call_operand.vmem [shape: f32[1,32], index: 3, kind: input, shape index: {}]
  %s4 = inlined_call_operand.hbm [shape: f32[17,32], index: 4, kind: input, shape index: {}]
  %s5 = inlined_call_operand.vmem [shape: f32[2,17,32], index: 5, kind: output, shape index: {}]
  %s6 = sld [smem:[#allocation0]]
  $region65: #{tpu_custom_call.1} parent=0
    _
  %s8 = ssub.s32 1, %s6
  %s9 = scalar_select 0, %s8, %s6
  $region1: #{tpu_custom_call.1} parent=0
    #allocation2 [shape = 'u8[8192]{0}', space=vmem, size = 0x2000, scoped, tag = 'input window, operand 0']
    #allocation3 [shape = 's32[2]{0}', space=sflag, size = 0x8, scoped, tag = 'scoped memory for tpu_custom_call.1']
    #allocation4 [shape = 'u8[4096]{0}', space=vmem, size = 0x1000, scoped, tag = 'input window, operand 1, single buffered']
    #allocation5 [shape = 's32[1]{0}', space=sflag, size = 0x4, scoped, tag = 'scoped memory for tpu_custom_call.1']
    #allocation6 [shape = 'u8[12288]{0}', space=vmem, size = 0x3000, scoped, tag = 'input window, operand 4, single buffered']
    %10 = vsyncpa [#allocation3], 0
    %s11 = scalar_lea.sflag [#allocation3], 1
    %12 = vsyncpa %s11, 0
    %13 = vsyncpa [#allocation5], 0
    loop: start=0, step=1, limit=4
    $region2: #{tpu_custom_call.1} parent=1 // loop_pre_header
      _
    $region3: #{tpu_custom_call.1} parent=1 // loop_header
      %s15 = sphi 0, %s19
      %p16 = scmp.ge.s32.totalorder %s15, 4
      %s25 = sphi 0, %s27
      %s28 = sphi 0, %s25
      %s29 = sphi 0, %s28
      %s45 = sphi 0, %s29
      %s49 = sphi 0, %s49
      %s51 = sphi 0, %s49
      %s52 = sphi 0, %s51
      %s66 = sphi 0, %s52
      %s70 = sphi 0, %s70
      %s72 = sphi 0, %s70
      %s73 = sphi 0, %s72
      %s87 = sphi 0, %s73
      %s91 = sphi 0, %s91
      %s93 = sphi 0, %s91
      %s94 = sphi 0, %s93
      %s108 = sphi 0, %s94
      %s112 = sphi 0, %s112
      %s114 = sphi 0, %s112
      %s115 = sphi 0, %s114
      %s129 = sphi 0, %s115
      %s135 = sphi 0, %s137
      %s138 = sphi 0, %s135
      %s139 = sphi 0, %s138
      %s155 = sphi 0, %s139
    $region4: #{tpu_custom_call.1} parent=1 // loop_header_branch
      %18 = sbr.rel (%p16) target = $region8
    $region5: #{tpu_custom_call.1} parent=1 // loop_body
      %s20 = ssub.s32 %s15, 1
      %s21 = ssub.s32 %s15, 2
      %s22 = sadd.s32 %s15, 1
      %s23 = ssub.s32 %s15, %s22
      %p24 = scmp.eq.s32.totalorder %s23, 0
      %s26 = sadd.s32 %s25, 1
      %s27 = scalar_select %p24, %s25, %s26
      %p30 = pneg %p24
      %p31 = scmp.eq.s32.totalorder %s15, 1
      %p32 = por %p30, %p31
      %p33 = scmp.ne.s32.totalorder %s25, %s28
      %p34 = scmp.eq.s32.totalorder %s15, 0
      %p35 = por %p33, %p34
      %p36 = scmp.ne.s32.totalorder %s25, %s28
      %p37 = scmp.eq.s32.totalorder %s20, 1
      %p38 = por %p36, %p37
      %p39 = scmp.ne.s32.totalorder %s28, %s29
      %p40 = scmp.eq.s32.totalorder %s20, 0
      %p41 = por %p39, %p40
      %p42 = scmp.ne.s32.totalorder %s28, %s29
      %p43 = scmp.eq.s32.totalorder %s21, 1
      %p44 = por %p42, %p43
      %p46 = scmp.ne.s32.totalorder %s29, %s45
      %p47 = scmp.eq.s32.totalorder %s21, 0
      %p48 = por %p46, %p47
      %s50 = sadd.s32 %s49, 1
      %p53 = scmp.eq.s32.totalorder %s15, 1
      %p54 = scmp.ne.s32.totalorder %s49, %s51
      %p55 = scmp.eq.s32.totalorder %s15, 0
      %p56 = por %p54, %p55
      %p57 = scmp.ne.s32.totalorder %s49, %s51
      %p58 = scmp.eq.s32.totalorder %s20, 1
      %p59 = por %p57, %p58
      %p60 = scmp.ne.s32.totalorder %s51, %s52
      %p61 = scmp.eq.s32.totalorder %s20, 0
      %p62 = por %p60, %p61
      %p63 = scmp.ne.s32.totalorder %s51, %s52
      %p64 = scmp.eq.s32.totalorder %s21, 1
      %p65 = por %p63, %p64
      %p67 = scmp.ne.s32.totalorder %s52, %s66
      %p68 = scmp.eq.s32.totalorder %s21, 0
      %p69 = por %p67, %p68
      %s71 = sadd.s32 %s70, 1
      %p74 = scmp.eq.s32.totalorder %s15, 1
      %p75 = scmp.ne.s32.totalorder %s70, %s72
      %p76 = scmp.eq.s32.totalorder %s15, 0
      %p77 = por %p75, %p76
      %p78 = scmp.ne.s32.totalorder %s70, %s72
      %p79 = scmp.eq.s32.totalorder %s20, 1
      %p80 = por %p78, %p79
      %p81 = scmp.ne.s32.totalorder %s72, %s73
      %p82 = scmp.eq.s32.totalorder %s20, 0
      %p83 = por %p81, %p82
      %p84 = scmp.ne.s32.totalorder %s72, %s73
      %p85 = scmp.eq.s32.totalorder %s21, 1
      %p86 = por %p84, %p85
      %p88 = scmp.ne.s32.totalorder %s73, %s87
      %p89 = scmp.eq.s32.totalorder %s21, 0
      %p90 = por %p88, %p89
      %s92 = sadd.s32 %s91, 1
      %p95 = scmp.eq.s32.totalorder %s15, 1
      %p96 = scmp.ne.s32.totalorder %s91, %s93
      %p97 = scmp.eq.s32.totalorder %s15, 0
      %p98 = por %p96, %p97
      %p99 = scmp.ne.s32.totalorder %s91, %s93
      %p100 = scmp.eq.s32.totalorder %s20, 1
      %p101 = por %p99, %p100
      %p102 = scmp.ne.s32.totalorder %s93, %s94
      %p103 = scmp.eq.s32.totalorder %s20, 0
      %p104 = por %p102, %p103
      %p105 = scmp.ne.s32.totalorder %s93, %s94
      %p106 = scmp.eq.s32.totalorder %s21, 1
      %p107 = por %p105, %p106
      %p109 = scmp.ne.s32.totalorder %s94, %s108
      %p110 = scmp.eq.s32.totalorder %s21, 0
      %p111 = por %p109, %p110
      %s113 = sadd.s32 %s112, 1
      %p116 = scmp.eq.s32.totalorder %s15, 1
      %p117 = scmp.ne.s32.totalorder %s112, %s114
      %p118 = scmp.eq.s32.totalorder %s15, 0
      %p119 = por %p117, %p118
      %p120 = scmp.ne.s32.totalorder %s112, %s114
      %p121 = scmp.eq.s32.totalorder %s20, 1
      %p122 = por %p120, %p121
      %p123 = scmp.ne.s32.totalorder %s114, %s115
      %p124 = scmp.eq.s32.totalorder %s20, 0
      %p125 = por %p123, %p124
      %p126 = scmp.ne.s32.totalorder %s114, %s115
      %p127 = scmp.eq.s32.totalorder %s21, 1
      %p128 = por %p126, %p127
      %p130 = scmp.ne.s32.totalorder %s115, %s129
      %p131 = scmp.eq.s32.totalorder %s21, 0
      %p132 = por %p130, %p131
      %s133 = ssub.s32 %s15, %s22
      %p134 = scmp.eq.s32.totalorder %s133, 0
      %s136 = sadd.s32 %s135, 1
      %s137 = scalar_select %p134, %s135, %s136
      %p140 = pneg %p134
      %p141 = scmp.eq.s32.totalorder %s15, 1
      %p142 = por %p140, %p141
      %p143 = scmp.ne.s32.totalorder %s135, %s138
      %p144 = scmp.eq.s32.totalorder %s15, 0
      %p145 = por %p143, %p144
      %p146 = scmp.ne.s32.totalorder %s135, %s138
      %p147 = scmp.eq.s32.totalorder %s20, 1
      %p148 = por %p146, %p147
      %p149 = scmp.ne.s32.totalorder %s138, %s139
      %p150 = scmp.eq.s32.totalorder %s20, 0
      %p151 = por %p149, %p150
      %p152 = scmp.ne.s32.totalorder %s138, %s139
      %p153 = scmp.eq.s32.totalorder %s21, 1
      %p154 = por %p152, %p153
      %p156 = scmp.ne.s32.totalorder %s139, %s155
      %p157 = scmp.eq.s32.totalorder %s21, 0
      %p158 = por %p156, %p157
      %p159 = scmp.le.s32.totalorder 1, %s15
      %p160 = scmp.lt.s32.totalorder %s15, 3
      %p161 = pnand %p159, %p160
      %p162 = pneg %p161
      // Predicated region
      $region9: #{tpu_custom_call.1} parent=5 // pred_check
        _
      $region10: #{tpu_custom_call.1} parent=5 // pred_check_branch
        %164 = sbr.rel (%p161) target = $region12
      $region11: #{tpu_custom_call.1} parent=5 // pred_region
        %s165 = ssub.s32 %s15, 1
        // Predicated region
        $region13: #{tpu_custom_call.1} parent=11 // pred_check
          %p166 = pneg %p62
        $region14: #{tpu_custom_call.1} parent=11 // pred_check_branch
          %168 = sbr.rel (%p166) target = $region16
        $region15: #{tpu_custom_call.1} parent=11 // pred_region
          %170 = vsyncadd [#allocation5], 0
          %s171 = sshll.u32 %s1, 4
          %s172 = int_to_ptr.hbm [resolvable:$true] %s171
          %s173 = sshll.u32 [#allocation4], 4
          %s174 = int_to_ptr.vmem [resolvable:$true] %s173
          %179 = dma.hbm_to_vmem [thread:$0]  %s172, 128, %s174, [#allocation5], 64, 64, 4
        $region16: #{tpu_custom_call.1} parent=11 // pred_fallthru
          _
        // Predicated region
        $region17: #{tpu_custom_call.1} parent=11 // pred_check
          %p180 = pneg %p83
        $region18: #{tpu_custom_call.1} parent=11 // pred_check_branch
          %182 = sbr.rel (%p180) target = $region20
        $region19: #{tpu_custom_call.1} parent=11 // pred_region
          _
        $region20: #{tpu_custom_call.1} parent=11 // pred_fallthru
          _
        // Predicated region
        $region21: #{tpu_custom_call.1} parent=11 // pred_check
          %p183 = pneg %p104
        $region22: #{tpu_custom_call.1} parent=11 // pred_check_branch
          %185 = sbr.rel (%p183) target = $region24
        $region23: #{tpu_custom_call.1} parent=11 // pred_region
          _
        $region24: #{tpu_custom_call.1} parent=11 // pred_fallthru
          _
        // Predicated region
        $region25: #{tpu_custom_call.1} parent=11 // pred_check
          %p186 = pneg %p125
        $region26: #{tpu_custom_call.1} parent=11 // pred_check_branch
          %188 = sbr.rel (%p186) target = $region28
        $region27: #{tpu_custom_call.1} parent=11 // pred_region
          %190 = vsyncadd [#allocation5], 0
          %s191 = sshll.u32 %s4, 4
          %s192 = int_to_ptr.hbm [resolvable:$true] %s191
          %s193 = sshll.u32 [#allocation6], 4
          %s194 = int_to_ptr.vmem [resolvable:$true] %s193
          %199 = dma.hbm_to_vmem [thread:$0]  %s192, 384, %s194, [#allocation5], 128, 128, 8
        $region28: #{tpu_custom_call.1} parent=11 // pred_fallthru
          _
      $region12: #{tpu_custom_call.1} parent=5 // pred_fallthru
        _
      %p200 = scmp.lt.s32.totalorder %s15, 2
      // Predicated region
      $region29: #{tpu_custom_call.1} parent=5 // pred_check
        %p201 = pneg %p200
      $region30: #{tpu_custom_call.1} parent=5 // pred_check_branch
        %203 = sbr.rel (%p201) target = $region32
      $region31: #{tpu_custom_call.1} parent=5 // pred_region
        // Predicated region
        $region33: #{tpu_custom_call.1} parent=31 // pred_check
          %p204 = pneg %p35
        $region34: #{tpu_custom_call.1} parent=31 // pred_check_branch
          %206 = sbr.rel (%p204) target = $region36
        $region35: #{tpu_custom_call.1} parent=31 // pred_region
          %s207 = sand.u32 %s25, 1
          %s208 = scalar_lea.sflag [#allocation3], %s207
          %s209 = sand.u32 %s25, 1
          %s210 = smul.addr %s209, 8
          %s211 = scalar_lea.vmem [#allocation2], %s210
          %213 = vsyncadd %s208, 0
          %s214 = smul.addr %s15, 2
          %s215 = smul.addr %s214, 4
          %s216 = scalar_lea.hbm %s0, %s215
          %s217 = sshll.u32 %s216, 4
          %s218 = int_to_ptr.hbm [resolvable:$true] %s217
          %s219 = sshll.u32 %s211, 4
          %s220 = int_to_ptr.vmem [resolvable:$true] %s219
          %225 = dma.hbm_to_vmem [thread:$0]  %s218, 128, %s220, %s208, 64, 64, 4
        $region36: #{tpu_custom_call.1} parent=31 // pred_fallthru
          _
      $region32: #{tpu_custom_call.1} parent=5 // pred_fallthru
        _
      %p226 = scmp.le.s32.totalorder 1, %s15
      %p227 = scmp.lt.s32.totalorder %s15, 3
      %p228 = pnand %p226, %p227
      %p229 = pneg %p228
      // Predicated region
      $region37: #{tpu_custom_call.1} parent=5 // pred_check
        _
      $region38: #{tpu_custom_call.1} parent=5 // pred_check_branch
        %231 = sbr.rel (%p228) target = $region40
      $region39: #{tpu_custom_call.1} parent=5 // pred_region
        %s232 = ssub.s32 %s15, 1
        %s233 = sand.u32 %s28, 1
        %s234 = scalar_lea.sflag [#allocation3], %s233
        %s235 = sand.u32 %s28, 1
        %s236 = smul.addr %s235, 8
        %s237 = scalar_lea.vmem [#allocation2], %s236
        // Predicated region
        $region41: #{tpu_custom_call.1} parent=39 // pred_check
          %p238 = pneg %p41
        $region42: #{tpu_custom_call.1} parent=39 // pred_check_branch
          %240 = sbr.rel (%p238) target = $region44
        $region43: #{tpu_custom_call.1} parent=39 // pred_region
          %242 = dma.done %s234, 128
        $region44: #{tpu_custom_call.1} parent=39 // pred_fallthru
          _
        // Predicated region
        $region45: #{tpu_custom_call.1} parent=39 // pred_check
          %p243 = pneg %p62
        $region46: #{tpu_custom_call.1} parent=39 // pred_check_branch
          %245 = sbr.rel (%p243) target = $region48
        $region47: #{tpu_custom_call.1} parent=39 // pred_region
          %247 = dma.done [#allocation5], 128
        $region48: #{tpu_custom_call.1} parent=39 // pred_fallthru
          _
        // Predicated region
        $region49: #{tpu_custom_call.1} parent=39 // pred_check
          %p248 = pneg %p125
        $region50: #{tpu_custom_call.1} parent=39 // pred_check_branch
          %250 = sbr.rel (%p248) target = $region52
        $region51: #{tpu_custom_call.1} parent=39 // pred_region
          %252 = dma.done [#allocation5], 384
        $region52: #{tpu_custom_call.1} parent=39 // pred_fallthru
          _
        %s253 = sand.u32 %s28, 1
        %s254 = scalar_lea.sflag [#allocation3], %s253
        %s255 = sand.u32 %s28, 1
        %s256 = smul.addr %s255, 8
        %s257 = scalar_lea.vmem [#allocation2], %s256
        %p258 = pneg %p41
        %p259 = pneg %p38
        %p260 = pneg %p62
        %p261 = pneg %p59
        %p262 = pneg %p83
        %p263 = pneg %p80
        %p264 = pneg %p104
        %p265 = pneg %p101
        %p266 = pneg %p125
        %p267 = pneg %p122
        %p268 = pneg %p151
        %p269 = pneg %p148
        %p270 = scmp.lt.s32.totalorder %s20, 1
        %s271 = scalar_select %p270, %s20, 1
        %s272 = smul.addr %s271, 3
        %s273 = smul.addr %s272, 8
        %s274 = scalar_lea.vmem %s5, %s273
        %p275 = scmp.lt.s32.totalorder %s20, 1
        %s276 = scalar_select %p275, %s20, 1
        %s277 = smul.addr %s276, 3
        %s278 = smul.addr %s277, 8
        %s279 = scalar_lea.vmem %s5, %s278
        %v281 = vld [vmem:[%s237] sm:$0xf]
        %v282 = vld [vmem:[%s237 + $0x4] sm:$0xf]
        %v283 = vld [vmem:[#allocation4] sm:$0xf]
        %v284 = vld [vmem:[#allocation4 + $0x4] sm:$0xf]
        %v285 = vld [vmem:[%s2] sm:$0x1]
        %v287 = vperm.slane %v285, 0
        %v291 = vunpack.c.l.b16 %v281
        %v292 = vunpack.c.l.b16 %v282
        %v293 = vpack.c.b16 %v292, %v291
        %v296 = vunpack.c.l.b16 %v283
        %v297 = vunpack.c.l.b16 %v284
        %v298 = vpack.c.b16 %v297, %v296
        %vm300 = vcmask 130048
        %v302 = vsel %vm300, %v293, 0
        %304 = vmatpush.bf16.msra.mxu0 0
        %305 = vmatpush.bf16.msra.mxu0 0
        %306 = vmatpush.bf16.msra.mxu0 0
        %307 = vmatpush.bf16.msra.mxu0 0
        %308 = vmatpush.bf16.msra.mxu0 0
        %309 = vmatpush.bf16.msra.mxu0 0
        %310 = vmatpush.bf16.msra.mxu0 0
        %311 = vmatpush.bf16.msra.mxu0 %v298
        %312 = vmatmul.bf16.gmra.mxu0 %v302
        %v313 = vpop.f32.mrf.mxu0
        %v314 = vadd.f32 %v287, %v313
        %v315 = vpop.f32.mrf.mxu0
        %v316 = vadd.f32 %v287, %v315
        %317 = vdwg.mxu0
        %v318 = vld [vmem:[#allocation6 + $0x1] sm:$0xff]
        %v319 = vld [vmem:[#allocation6 + $0x9] sm:$0xff]
        %v320 = vadd.f32 %v314, %v318
        %v321 = vadd.f32 %v316, %v319
        %v322 = vld [vmem:[%s3] sm:$0x1]
        %v323 = vld [vmem:[#allocation6] sm:$0x1]
        %v324 = vadd.f32 %v322, %v323
        %vm327 = vcmask 1040384
        %v328 = vrot.slane %v320, 7
        %v329 = vrot.slane %v321, 7
        %v330 = vsel %vm327, %v328, %v329
        %v334 = vsel %vm327, %v324, %v328
        %vm335 = vcmask 261120
        %336 = vst.msk [vmem:[%s279] sm:$0xff] %vm335, %v334
        %337 = vst.msk [vmem:[%s279 + $0x8] sm:$0xff] %vm335, %v330
        %vm338 = vcmask 253952
        %339 = vst.msk [vmem:[%s279 + $0x10] sm:$0x1] %vm338, %v329
        %p340 = scmp.lt.s32.totalorder %s20, 1
        %s341 = scalar_select %p340, %s20, 1
        %s342 = smul.addr %s341, 3
        %s343 = smul.addr %s342, 8
        %s344 = scalar_lea.vmem %s5, %s343
        // Predicated region
        $region53: #{tpu_custom_call.1} parent=39 // pred_check
          %p345 = pneg %p148
        $region54: #{tpu_custom_call.1} parent=39 // pred_check_branch
          %347 = sbr.rel (%p345) target = $region56
        $region55: #{tpu_custom_call.1} parent=39 // pred_region
          _
        $region56: #{tpu_custom_call.1} parent=39 // pred_fallthru
          _
      $region40: #{tpu_custom_call.1} parent=5 // pred_fallthru
        _
      %p348 = scmp.le.s32.totalorder 2, %s15
      // Predicated region
      $region57: #{tpu_custom_call.1} parent=5 // pred_check
        %p349 = pneg %p348
      $region58: #{tpu_custom_call.1} parent=5 // pred_check_branch
        %351 = sbr.rel (%p349) target = $region60
      $region59: #{tpu_custom_call.1} parent=5 // pred_region
        %s352 = ssub.s32 %s15, 2
        // Predicated region
        $region61: #{tpu_custom_call.1} parent=59 // pred_check
          %p353 = pneg %p154
        $region62: #{tpu_custom_call.1} parent=59 // pred_check_branch
          %355 = sbr.rel (%p353) target = $region64
        $region63: #{tpu_custom_call.1} parent=59 // pred_region
          %p356 = scmp.lt.s32.totalorder %s21, 1
          %s357 = scalar_select %p356, %s21, 1
          %s358 = smul.addr %s357, 3
          %s359 = smul.addr %s358, 8
          %s360 = scalar_lea.vmem %s5, %s359
        $region64: #{tpu_custom_call.1} parent=59 // pred_fallthru
          _
      $region60: #{tpu_custom_call.1} parent=5 // pred_fallthru
        _
    $region6: #{tpu_custom_call.1} parent=1 // loop_footer
      %s19 = sadd.s32 1, %s15
    $region7: #{tpu_custom_call.1} parent=1 // loop_footer_branch
      %14 = sbr.rel target = $region3
    $region8: #{tpu_custom_call.1} parent=1 // loop_exit
      _
    %361 = vsyncpa [#allocation3], 1
    %s362 = scalar_lea.sflag [#allocation3], 1
    %363 = vsyncpa %s362, 1
    %364 = vsyncpa [#allocation5], 1

</llo_original>
